<compile_context>
chip_gen: v7x
topology: tpu7x:2x2x1
jax: 0.10.0
libtpu: 0.0.40
codegen_flags: <defaults>
</compile_context>

<pallas_src>
import functools

import jax
import jax.numpy as jnp
from jax import lax
from jax.experimental import pallas as pl
from jax.experimental.pallas import tpu as pltpu

_LANE = 128
_SUBLANE = 8
# Conservative resident-table budget: keeps the "DMA the table once" plan well
# inside v7x's 64 MiB physical / 32 MiB default-scoped VMEM, even with the
# default double-buffering of every input block.
_TABLE_BUDGET_BYTES = 24 * 1024 * 1024


def _round_up(x, m):
    return (x + m - 1) // m * m


def _cdiv(a, b):
    return (a + b - 1) // b


# --------------------------------------------------------------------------
# Kernels
# --------------------------------------------------------------------------
def _pns_dense_kernel(obs_ref, w_ref, b_ref, out_ref):
    # obs_ref: (TB, D), w_ref: (D, Cp), b_ref: (1, Cp), out_ref: (TB, Cp)
    out_ref[...] = (
        jnp.dot(obs_ref[...], w_ref[...], preferred_element_type=jnp.float32)
        + b_ref[...]
    ).astype(out_ref.dtype)


def _pns_select_kernel(rid_ref, obs_ref, wcat_ref, bias_ref, out_ref,
                       *, num_robots, c_pad):
    # rid_ref : (TB, 1)    int32  robot id of each row in this tile
    # obs_ref : (TB, D)           obs rows for this tile
    # wcat_ref: (D, R*Cp)         resident weight table, lane-aligned per-robot groups
    # bias_ref: (R, Cp)    f32    resident biases
    # out_ref : (TB, Cp)   f32
    #
    # Loop per robot over a *static, lane-aligned* slice of the resident table
    # so the live set stays ~2*TB*Cp f32 (contrib + acc) instead of TB*R*Cp,
    # which would overflow the 64x4KiB vreg file and spill to VMEM.
    obs = obs_ref[...]
    rid = rid_ref[...]
    acc = jnp.zeros(out_ref.shape, jnp.float32)
    for r in range(num_robots):                                # small static R
        w_r = wcat_ref[:, r * c_pad:(r + 1) * c_pad]           # free ref slice
        contrib = (jnp.dot(obs, w_r, preferred_element_type=jnp.float32)
                   + bias_ref[r:r + 1, :])
        acc = jnp.where(rid == r, contrib, acc)                # per-row select
    out_ref[...] = acc.astype(out_ref.dtype)
    # TODO(synk): for large R, replace compute-all-then-select with a grouped
    # matmul (argsort rows by robot id + PrefetchScalarGridSpec group offsets).


# --------------------------------------------------------------------------
# Wrapper
# --------------------------------------------------------------------------
def prepare_pns_params(weights, biases, *, compute_dtype=jnp.float32):
    """One-time parameter preprocessing (hoisted out of forward).

    weights: [R, obs_dim, sensor_channel]  (pre-transposed torch weights)
    biases : [R, sensor_channel]
    Padding / transpose / concat are done ONCE here so the per-call wrapper
    never pays an extra XLA pass over the whole table in HBM.
    """
    weights = jnp.asarray(weights)
    biases = jnp.asarray(biases, jnp.float32)
    R, D, C = weights.shape
    c_pad = _round_up(C, _LANE)                                   # lane-dense output
    w_pad = jnp.pad(weights, ((0, 0), (0, 0), (0, c_pad - C))).astype(compute_dtype)
    b_pad = jnp.pad(biases, ((0, 0), (0, c_pad - C)))             # (R, Cp) f32
    wcat = jnp.transpose(w_pad, (1, 0, 2)).reshape(D, R * c_pad)  # (D, R*Cp)
    return dict(num_robots=R, obs_dim=D, sensor_channel=C, c_pad=c_pad,
                compute_dtype=w_pad.dtype, w_pad=w_pad, b_pad=b_pad, wcat=wcat)


def _pick_row_tile(b8, cap):
    tb = min(cap, b8)
    # v7x has 2 TensorCores: ensure the 'parallel' batch axis has >=2 grid
    # steps whenever the batch allows it, so both cores get work.
    if b8 >= 2 * _SUBLANE:
        tb = min(tb, _round_up(_cdiv(b8, 2), _SUBLANE))
    return max(_SUBLANE, _round_up(tb, _SUBLANE))


def _compiler_params(vmem_need_bytes):
    vmem_limit = max(16 << 20, min(2 * int(vmem_need_bytes) + (8 << 20), 48 << 20))
    return pltpu.CompilerParams(
        dimension_semantics=("parallel",),
        vmem_limit_bytes=int(vmem_limit))


def _dense_call(obs_p, w, b, tb):
    """(Bp, D) @ (D, Cp) + (1, Cp) with a resident weight/bias and tiled batch."""
    bp, D = obs_p.shape
    c_pad = w.shape[1]
    need = (2 * tb * (D + c_pad) * 4
            + 2 * (w.size * w.dtype.itemsize + b.size * 4))
    # NOTE: w/b are grid-invariant; for multi-MiB tables consider
    # pipeline_mode=pl.Buffered(1) on their specs to skip double-buffering.
    return pl.pallas_call(
        _pns_dense_kernel,
        out_shape=jax.ShapeDtypeStruct((bp, c_pad), jnp.float32),
        grid=(pl.cdiv(bp, tb),),
        in_specs=[
            pl.BlockSpec((tb, D), lambda i: (i, 0)),
            pl.BlockSpec((D, c_pad), lambda i: (0, 0)),   # resident weight
            pl.BlockSpec((1, c_pad), lambda i: (0, 0)),   # resident bias
        ],
        out_specs=pl.BlockSpec((tb, c_pad), lambda i: (i, 0)),
        compiler_params=_compiler_params(need),
    )(obs_p, w, b)


def _static_int(x):
    try:
        return int(x)
    except (TypeError, jax.errors.ConcretizationTypeError):
        return None


def _check_robot_ids(rid, num_robots):
    # Match the torch module's missing-key failure when ids are concrete.
    # Under tracing this cannot be checked (invalid ids would yield zero rows).
    try:
        bad = bool(jnp.any((rid < 0) | (rid >= num_robots)))
    except jax.errors.ConcretizationTypeError:
        return
    if bad:
        raise KeyError(f"robot_id out of range [0, {num_robots})")


def pns_sensor_adaptor_forward(obs, robot_id, params, *,
                               dense_row_tile=512, select_row_tile=256):
    """Pallas implementation of PNSSensorAdaptor.forward.

    obs:      [B, obs_dim]
    robot_id: python int / 0-d array (one Linear over the whole batch) OR a
              length-B list / array of robot ids (per-row Linear)
    params:   output of prepare_pns_params()
    returns:  [B, sensor_channel] float32
    """
    p = params
    obs = jnp.asarray(obs)
    B, D = obs.shape
    R, C, c_pad = p["num_robots"], p["sensor_channel"], p["c_pad"]
    assert D == p["obs_dim"], f"Max input dimension is {p['obs_dim']}"

    obs_k = obs.astype(p["compute_dtype"])

    # Pad the batch only up to the sublane multiple (8); the grid handles the
    # ragged final block itself (OOB reads padded, OOB writes dropped), so we
    # never copy obs just to round it up to a tile multiple.
    b8 = _round_up(B, _SUBLANE)
    if b8 != B:
        obs_k = jnp.pad(obs_k, ((0, b8 - B), (0, 0)))

    per_row = isinstance(robot_id, (list, tuple)) or (
        hasattr(robot_id, "ndim") and robot_id.ndim > 0)

    if not per_row:
        # ---- fast path: one Linear over the whole batch ----
        tb = _pick_row_tile(b8, dense_row_tile)
        rid_static = _static_int(robot_id)
        if rid_static is not None:
            if not 0 <= rid_static < R:
                raise KeyError(f"robot_id {rid_static} not in [0, {R})")
            w = p["w_pad"][rid_static]                     # (D, Cp)
            b = p["b_pad"][rid_static:rid_static + 1]      # (1, Cp)
        else:
            # traced 0-d robot id (e.g. under jax.jit): dynamic table lookup
            rid_dyn = jnp.asarray(robot_id, jnp.int32)
            w = lax.dynamic_index_in_dim(p["w_pad"], rid_dyn, 0, keepdims=False)
            b = lax.dynamic_index_in_dim(p["b_pad"], rid_dyn, 0, keepdims=True)
        out_p = _dense_call(obs_k, w, b, tb)
        return out_p[:B, :C]

    # ---- per-row robot ids ----
    rid = jnp.asarray(robot_id, jnp.int32)
    assert rid.shape == (B,), "Need robot_id for each piece of obs"
    _check_robot_ids(rid, R)
    rid_p = rid if b8 == B else jnp.pad(rid, ((0, b8 - B),))
    rid_p = rid_p.reshape(b8, 1)

    tb = _pick_row_tile(b8, select_row_tile)

    table_bytes = (p["wcat"].size * p["wcat"].dtype.itemsize
                   + p["b_pad"].size * 4)
    if 2 * table_bytes > _TABLE_BUDGET_BYTES:
        # Resident table would blow the (v7x) VMEM budget: degrade gracefully
        # to R dense matmuls over the batch + masked select (per-step weight
        # footprint stays D*Cp).  TODO(synk): grouped matmul for large R.
        out_p = jnp.zeros((b8, c_pad), jnp.float32)
        for r in range(R):
            o_r = _dense_call(obs_k, p["w_pad"][r], p["b_pad"][r:r + 1], tb)
            out_p = jnp.where(rid_p == r, o_r, out_p)
        return out_p[:B, :C]

    need = 2 * tb * (D + c_pad + 1) * 4 + 2 * table_bytes
    kernel = functools.partial(_pns_select_kernel, num_robots=R, c_pad=c_pad)
    # NOTE: wcat / bias are grid-invariant; for multi-MiB tables consider
    # pipeline_mode=pl.Buffered(1) on those specs to skip double-buffering.
    out_p = pl.pallas_call(
        kernel,
        out_shape=jax.ShapeDtypeStruct((b8, c_pad), jnp.float32),
        grid=(pl.cdiv(b8, tb),),
        in_specs=[
            pl.BlockSpec((tb, 1), lambda i: (i, 0)),          # robot ids
            pl.BlockSpec((tb, D), lambda i: (i, 0)),          # obs rows
            pl.BlockSpec((D, R * c_pad), lambda i: (0, 0)),   # resident weight table
            pl.BlockSpec((R, c_pad), lambda i: (0, 0)),       # resident biases
        ],
        out_specs=pl.BlockSpec((tb, c_pad), lambda i: (i, 0)),
        compiler_params=_compiler_params(need),
    )(rid_p, obs_k, p["wcat"], p["b_pad"])
    return out_p[:B, :C]


def _init_params(key, num_robots, obs_dim, sensor_channel):
    """Deterministic nn.Linear-style init: U(-1/sqrt(in), 1/sqrt(in))."""
    bound = 1.0 / jnp.sqrt(jnp.float32(obs_dim))
    kw, kb = jax.random.split(key)
    # stored pre-transposed: [R, obs_dim, sensor_channel] (= torch weight.T per robot)
    weights = jax.random.uniform(
        kw, (num_robots, obs_dim, sensor_channel), jnp.float32, -bound, bound)
    biases = jax.random.uniform(
        kb, (num_robots, sensor_channel), jnp.float32, -bound, bound)
    return weights, biases


if __name__ == "__main__":
    key = jax.random.PRNGKey(0)
    k_params, k_obs, k_rid = jax.random.split(key, 3)

    B, obs_dim, sensor_channel, num_robots = 8, 32, 16, 3

    weights, biases = _init_params(k_params, num_robots, obs_dim, sensor_channel)
    params = prepare_pns_params(weights, biases)      # one-time, hoisted prep

    obs = jax.random.normal(k_obs, (B, obs_dim), jnp.float32)
    robot_ids = jax.random.randint(k_rid, (B,), 0, num_robots).astype(jnp.int32)

    # --- list-of-robot-ids case (per-row Linear, like the python loop + stack) ---
    out_list = jax.block_until_ready(
        pns_sensor_adaptor_forward(obs, robot_ids, params))

    # --- single robot_id case (one Linear applied to the whole batch) ---
    out_single = jax.block_until_ready(
        pns_sensor_adaptor_forward(obs, 1, params))

    # --- single robot_id as a traced scalar under jit (dynamic-lookup path) ---
    out_single_jit = jax.block_until_ready(
        jax.jit(lambda o, r: pns_sensor_adaptor_forward(o, r, params))(
            obs, jnp.int32(1)))

    # --- ragged batch (B not a multiple of 8 / tile) exercises pad+ragged grid ---
    B2 = 13
    obs2 = jax.random.normal(k_obs, (B2, obs_dim), jnp.float32)
    rid2 = jax.random.randint(k_rid, (B2,), 0, num_robots).astype(jnp.int32)
    out_ragged = jax.block_until_ready(
        pns_sensor_adaptor_forward(obs2, rid2, params))

    # Reference check in plain JAX (same semantics as the torch module).
    ref_list = jnp.einsum("bd,bdc->bc", obs, weights[robot_ids]) + biases[robot_ids]
    ref_single = obs @ weights[1] + biases[1]
    ref_ragged = jnp.einsum("bd,bdc->bc", obs2, weights[rid2]) + biases[rid2]
    assert out_list.shape == (B, sensor_channel)
    assert jnp.allclose(out_list, ref_list, atol=1e-5, rtol=1e-5)
    assert jnp.allclose(out_single, ref_single, atol=1e-5, rtol=1e-5)
    assert jnp.allclose(out_single_jit, ref_single, atol=1e-5, rtol=1e-5)
    assert jnp.allclose(out_ragged, ref_ragged, atol=1e-5, rtol=1e-5)

    print("KERNEL_OK")
</pallas_src>

<mosaic_0001>
module attributes {stable_mosaic.version = 11 : i64} {
  func.func @_pns_select_kernel(%arg0: i32, %arg1: memref<8x1xi32, #tpu.memory_space<vmem>>, %arg2: memref<8x32xf32, #tpu.memory_space<vmem>>, %arg3: memref<32x384xf32, #tpu.memory_space<vmem>>, %arg4: memref<3x128xf32, #tpu.memory_space<vmem>>, %arg5: memref<8x128xf32, #tpu.memory_space<vmem>>) attributes {dimension_semantics = [#tpu.dimension_semantics<parallel>], iteration_bounds = array<i64: 1>, scalar_prefetch = 0 : i64, scratch_operands = 0 : i64, tpu.core_type = #tpu.core_type<tc>, window_params = [{transform_indices = @transform_0, window_bounds = array<i64: 8, 1>}, {transform_indices = @transform_1, window_bounds = array<i64: 8, 32>}, {pipeline_mode = #tpu.pipeline_mode<synchronous>, transform_indices = @transform_2, window_bounds = array<i64: 32, 384>}, {pipeline_mode = #tpu.pipeline_mode<synchronous>, transform_indices = @transform_3, window_bounds = array<i64: 3, 128>}, {transform_indices = @transform_4, window_bounds = array<i64: 8, 128>}]} {
    %c0 = arith.constant 0 : index
    %c0_0 = arith.constant 0 : index
    %0 = vector.load %arg2[%c0, %c0_0] : memref<8x32xf32, #tpu.memory_space<vmem>>, vector<8x32xf32>
    %c0_1 = arith.constant 0 : index
    %c0_2 = arith.constant 0 : index
    %1 = vector.load %arg1[%c0_1, %c0_2] : memref<8x1xi32, #tpu.memory_space<vmem>>, vector<8x1xi32>
    %cst = arith.constant 0.000000e+00 : f32
    %2 = vector.broadcast %cst : f32 to vector<8x128xf32>
    %c0_3 = arith.constant 0 : index
    %c0_4 = arith.constant 0 : index
    %3 = vector.load %arg3[%c0_3, %c0_4] : memref<32x384xf32, #tpu.memory_space<vmem>>, vector<32x128xf32>
    %cst_5 = arith.constant dense<0.000000e+00> : vector<8x128xf32>
    %4 = tpu.matmul %0, %3, %cst_5 {dimension_numbers = #tpu.dot_dimension_numbers<[1], [0], [0], [1], [0, 0, 1, 1], [], []>} : vector<8x32xf32>, vector<32x128xf32>, vector<8x128xf32> -> vector<8x128xf32>
    %c0_6 = arith.constant 0 : index
    %c0_7 = arith.constant 0 : index
    %5 = vector.load %arg4[%c0_6, %c0_7] : memref<3x128xf32, #tpu.memory_space<vmem>>, vector<1x128xf32>
    %6 = vector.broadcast %5 : vector<1x128xf32> to vector<8x128xf32>
    %7 = arith.addf %4, %6 : vector<8x128xf32>
    %c0_i32 = arith.constant 0 : i32
    %8 = vector.broadcast %c0_i32 : i32 to vector<8x1xi32>
    %9 = arith.cmpi eq, %1, %8 : vector<8x1xi32>
    %10 = vector.shape_cast %9 : vector<8x1xi1> to vector<8x1xi1>
    %11 = vector.broadcast %10 : vector<8x1xi1> to vector<8x128xi1>
    %12 = arith.select %11, %7, %2 : vector<8x128xi1>, vector<8x128xf32>
    %c0_8 = arith.constant 0 : index
    %c128 = arith.constant 128 : index
    %13 = vector.load %arg3[%c0_8, %c128] : memref<32x384xf32, #tpu.memory_space<vmem>>, vector<32x128xf32>
    %cst_9 = arith.constant dense<0.000000e+00> : vector<8x128xf32>
    %14 = tpu.matmul %0, %13, %cst_9 {dimension_numbers = #tpu.dot_dimension_numbers<[1], [0], [0], [1], [0, 0, 1, 1], [], []>} : vector<8x32xf32>, vector<32x128xf32>, vector<8x128xf32> -> vector<8x128xf32>
    %c1 = arith.constant 1 : index
    %c0_10 = arith.constant 0 : index
    %15 = vector.load %arg4[%c1, %c0_10] : memref<3x128xf32, #tpu.memory_space<vmem>>, vector<1x128xf32>
    %16 = vector.broadcast %15 : vector<1x128xf32> to vector<8x128xf32>
    %17 = arith.addf %14, %16 : vector<8x128xf32>
    %c1_i32 = arith.constant 1 : i32
    %18 = vector.broadcast %c1_i32 : i32 to vector<8x1xi32>
    %19 = arith.cmpi eq, %1, %18 : vector<8x1xi32>
    %20 = vector.shape_cast %19 : vector<8x1xi1> to vector<8x1xi1>
    %21 = vector.broadcast %20 : vector<8x1xi1> to vector<8x128xi1>
    %22 = arith.select %21, %17, %12 : vector<8x128xi1>, vector<8x128xf32>
    %c0_11 = arith.constant 0 : index
    %c256 = arith.constant 256 : index
    %23 = vector.load %arg3[%c0_11, %c256] : memref<32x384xf32, #tpu.memory_space<vmem>>, vector<32x128xf32>
    %cst_12 = arith.constant dense<0.000000e+00> : vector<8x128xf32>
    %24 = tpu.matmul %0, %23, %cst_12 {dimension_numbers = #tpu.dot_dimension_numbers<[1], [0], [0], [1], [0, 0, 1, 1], [], []>} : vector<8x32xf32>, vector<32x128xf32>, vector<8x128xf32> -> vector<8x128xf32>
    %c2 = arith.constant 2 : index
    %c0_13 = arith.constant 0 : index
    %25 = vector.load %arg4[%c2, %c0_13] : memref<3x128xf32, #tpu.memory_space<vmem>>, vector<1x128xf32>
    %26 = vector.broadcast %25 : vector<1x128xf32> to vector<8x128xf32>
    %27 = arith.addf %24, %26 : vector<8x128xf32>
    %c2_i32 = arith.constant 2 : i32
    %28 = vector.broadcast %c2_i32 : i32 to vector<8x1xi32>
    %29 = arith.cmpi eq, %1, %28 : vector<8x1xi32>
    %30 = vector.shape_cast %29 : vector<8x1xi1> to vector<8x1xi1>
    %31 = vector.broadcast %30 : vector<8x1xi1> to vector<8x128xi1>
    %32 = arith.select %31, %27, %22 : vector<8x128xi1>, vector<8x128xf32>
    %c0_14 = arith.constant 0 : index
    %c0_15 = arith.constant 0 : index
    %33 = vector.load %arg5[%c0_14, %c0_15] : memref<8x128xf32, #tpu.memory_space<vmem>>, vector<8x128xf32>
    tpu.vector_store %arg5[%c0_14, %c0_15], %32 {strides = array<i32>} : memref<8x128xf32, #tpu.memory_space<vmem>>, vector<8x128xf32>,
    return
  }
  func.func @transform_0(%arg0: i32) -> (i32, i32) {
    %c0_i32 = arith.constant 0 : i32
    %c0_i32_0 = arith.constant 0 : i32
    return %arg0, %c0_i32 : i32, i32
  }
  func.func @transform_1(%arg0: i32) -> (i32, i32) {
    %c0_i32 = arith.constant 0 : i32
    %c0_i32_0 = arith.constant 0 : i32
    return %arg0, %c0_i32 : i32, i32
  }
  func.func @transform_2(%arg0: i32) -> (i32, i32) {
    %c0_i32 = arith.constant 0 : i32
    %c0_i32_0 = arith.constant 0 : i32
    %c0_i32_1 = arith.constant 0 : i32
    return %c0_i32, %c0_i32_0 : i32, i32
  }
  func.func @transform_3(%arg0: i32) -> (i32, i32) {
    %c0_i32 = arith.constant 0 : i32
    %c0_i32_0 = arith.constant 0 : i32
    %c0_i32_1 = arith.constant 0 : i32
    return %c0_i32, %c0_i32_0 : i32, i32
  }
  func.func @transform_4(%arg0: i32) -> (i32, i32) {
    %c0_i32 = arith.constant 0 : i32
    %c0_i32_0 = arith.constant 0 : i32
    return %arg0, %c0_i32 : i32, i32
  }
}

</mosaic_0001>

<llo_original>
// kernel: tpu_custom_call.1
$region0: #{tpu_custom_call.1}
  #allocation0 [shape = 'u32[]', space=smem, size = 0x4, offset = 0x4, fixed_abs, tag = 'smem constant byte address 0x4 - core index']
  #allocation1 [shape = 'u32[144,128]{1,0:T(1,128)}', space=vmem, size = 0x12000, scoped, tag = 'internal scratch']
  %s0 = inlined_call_operand.vmem [shape: s32[8,1], index: 0, kind: input, shape index: {}]
  %s1 = inlined_call_operand.vmem [shape: f32[8,32], index: 1, kind: input, shape index: {}]
  %s2 = inlined_call_operand.hbm [shape: f32[32,384], index: 2, kind: input, shape index: {}]
  %s3 = inlined_call_operand.vmem [shape: f32[3,128], index: 3, kind: input, shape index: {}]
  %s4 = inlined_call_operand.hbm [shape: f32[8,128], index: 4, kind: output, shape index: {}]
  %s5 = sld [smem:[#allocation0]]
  $region30: #{tpu_custom_call.1} parent=0
    _
  %s7 = ssub.s32 1, %s5
  %s8 = scalar_select 0, %s7, %s5
  $region1: #{tpu_custom_call.1} parent=0
    #allocation2 [shape = 'u8[49152]{0}', space=vmem, size = 0xc000, scoped, tag = 'input window, operand 2, single buffered']
    #allocation3 [shape = 's32[1]{0}', space=sflag, size = 0x4, scoped, tag = 'scoped memory for tpu_custom_call.1']
    #allocation4 [shape = 's32[1]{0}', space=sflag, size = 0x4, scoped, tag = 'scoped memory for tpu_custom_call.1']
    #allocation5 [shape = 'u8[4096]{0}', space=vmem, size = 0x1000, scoped, tag = 'output window, operand 0, single buffered']
    %9 = vsyncpa [#allocation3], 0
    %10 = vsyncpa [#allocation4], 0
    // Predicated region
    $region2: #{tpu_custom_call.1} parent=1 // pred_check
      _
    $region3: #{tpu_custom_call.1} parent=1 // pred_check_branch
      %12 = sbr.rel (0) target = $region5
    $region4: #{tpu_custom_call.1} parent=1 // pred_region
      _
    $region5: #{tpu_custom_call.1} parent=1 // pred_fallthru
      _
    // Predicated region
    $region6: #{tpu_custom_call.1} parent=1 // pred_check
      _
    $region7: #{tpu_custom_call.1} parent=1 // pred_check_branch
      %14 = sbr.rel (0) target = $region9
    $region8: #{tpu_custom_call.1} parent=1 // pred_region
      _
    $region9: #{tpu_custom_call.1} parent=1 // pred_fallthru
      _
    // Predicated region
    $region10: #{tpu_custom_call.1} parent=1 // pred_check
      _
    $region11: #{tpu_custom_call.1} parent=1 // pred_check_branch
      %16 = sbr.rel (0) target = $region13
    $region12: #{tpu_custom_call.1} parent=1 // pred_region
      %s18 = ssub.s32 1536, 1536
      %19 = vsyncadd [#allocation3], %s18
      %s20 = sshll.u32 [#allocation2], 4
      %s21 = int_to_ptr.vmem [resolvable:$true] %s20
      %26 = dma.hbm_to_vmem [thread:$0]  %s2, 1536, %s21, [#allocation3], 384, 384, 24
    $region13: #{tpu_custom_call.1} parent=1 // pred_fallthru
      _
    // Predicated region
    $region14: #{tpu_custom_call.1} parent=1 // pred_check
      _
    $region15: #{tpu_custom_call.1} parent=1 // pred_check_branch
      %28 = sbr.rel (0) target = $region17
    $region16: #{tpu_custom_call.1} parent=1 // pred_region
      _
    $region17: #{tpu_custom_call.1} parent=1 // pred_fallthru
      _
    // Predicated region
    $region18: #{tpu_custom_call.1} parent=1 // pred_check
      _
    $region19: #{tpu_custom_call.1} parent=1 // pred_check_branch
      %30 = sbr.rel (0) target = $region21
    $region20: #{tpu_custom_call.1} parent=1 // pred_region
      %31 = dma.done [#allocation3], 1536
    $region21: #{tpu_custom_call.1} parent=1 // pred_fallthru
      _
    %v32 = vld [vmem:[%s1] sm:$0xff]
    %v33 = vld [vmem:[%s0] sm:$0xff]
    %v34 = vld [vmem:[#allocation2] sm:$0xff]
    %v35 = vld [vmem:[#allocation2 + $0x18] sm:$0xff]
    %v36 = vld [vmem:[#allocation2 + $0x30] sm:$0xff]
    %v37 = vld [vmem:[#allocation2 + $0x48] sm:$0xff]
    %v38 = vld [vmem:[%s3] sm:$0x1]
    %v39 = vlaneseq
    %v40 = vshrl.u32 %v39, 7
    %v41 = vsub.s32 0, %v40
    %v42 = vrot.slane %v38, %v41
    %vm43 = vcmask 261120
    %v45 = vsel %vm43, %v32, 0
    %47 = vmatprep.subr.mxu0 0.0
    %48 = vmatpush1.msra.mxu0 %v34
    %49 = vmatprep.subr.mxu0 0.0
    %50 = vmatpush1.msra.mxu0 %v35
    %51 = vmatprep.subr.mxu0 0.0
    %52 = vmatpush1.msra.mxu0 %v36
    %53 = vmatprep.subr.mxu0 0.0
    %54 = vmatpush1.msra.mxu0 %v37
    %55 = vmatprep.subr.mxu0 0.0
    %56 = vmatpush1.msra.mxu0 0.0
    %57 = vmatprep.subr.mxu0 0.0
    %58 = vmatpush1.msra.mxu0 0.0
    %59 = vmatprep.subr.mxu0 0.0
    %60 = vmatpush1.msra.mxu0 0.0
    %61 = vmatprep.subr.mxu0 0.0
    %62 = vmatpush1.msra.mxu0 0.0
    %63 = vmatprep.subr.mxu0 0.0
    %64 = vmatpush1.msra.mxu0 0.0
    %65 = vmatprep.subr.mxu0 0.0
    %66 = vmatpush1.msra.mxu0 0.0
    %67 = vmatprep.subr.mxu0 0.0
    %68 = vmatpush1.msra.mxu0 0.0
    %69 = vmatprep.subr.mxu0 0.0
    %70 = vmatpush1.msra.mxu0 0.0
    %71 = vmatprep.subr.mxu0 0.0
    %72 = vmatpush1.msra.mxu0 0.0
    %73 = vmatprep.subr.mxu0 0.0
    %74 = vmatpush1.msra.mxu0 0.0
    %75 = vmatprep.subr.mxu0 0.0
    %76 = vmatpush1.msra.mxu0 0.0
    %77 = vmatprep.subr.mxu0 0.0
    %78 = vmatpush1.msra.mxu0 0.0
    %79 = vmatprep.subr.mxu0 0.0
    %80 = vmatpush1.msra.mxu0 0.0
    %81 = vmatprep.subr.mxu0 0.0
    %82 = vmatpush1.msra.mxu0 0.0
    %83 = vmatprep.subr.mxu0 0.0
    %84 = vmatpush1.msra.mxu0 0.0
    %85 = vmatprep.subr.mxu0 0.0
    %86 = vmatpush1.msra.mxu0 0.0
    %87 = vmatprep.subr.mxu0 0.0
    %88 = vmatpush1.msra.mxu0 0.0
    %89 = vmatprep.subr.mxu0 0.0
    %90 = vmatpush1.msra.mxu0 0.0
    %91 = vmatprep.subr.mxu0 0.0
    %92 = vmatpush1.msra.mxu0 0.0
    %93 = vmatprep.subr.mxu0 0.0
    %94 = vmatpush1.msra.mxu0 0.0
    %95 = vmatprep.subr.mxu0 0.0
    %96 = vmatpush1.msra.mxu0 0.0
    %97 = vmatprep.subr.mxu0 0.0
    %98 = vmatpush1.msra.mxu0 0.0
    %99 = vmatprep.subr.mxu0 0.0
    %100 = vmatpush1.msra.mxu0 0.0
    %101 = vmatprep.subr.mxu0 0.0
    %102 = vmatpush1.msra.mxu0 0.0
    %103 = vmatprep.subr.mxu0 0.0
    %104 = vmatpush1.msra.mxu0 0.0
    %105 = vmatprep.subr.mxu0 0.0
    %106 = vmatpush1.msra.mxu0 0.0
    %107 = vmatprep.subr.mxu0 0.0
    %108 = vmatpush1.msra.mxu0 0.0
    %109 = vmatprep.subr.mxu0 0.0
    %110 = vmatpush1.msra.mxu0 0.0
    %111 = vmatprep.mubr.f32.mxu0 0.0
    %112 = vmatmul.mubr.f32.gmra.mrb[0].mxu0 %v45
    %v113 = vpop.f32.mrb[0].mxu0
    %v114 = vadd.f32 %v42, %v113
    %v115 = vpop.f32.mrb[0].mxu0
    %116 = vdwg.mxu0
    %vm117 = vcmp.eq.s32.totalorder %v33, 0
    %v118 = vsel %vm117, 1, 0
    %119 = vset.pattern.permute.xlu0 0
    %120 = vperm.xlu0 %119, %v118
    %v121 = vpop.permute.xlu0 %120
    %vm122 = vcmp.eq.s32.totalorder %v121, 1
    %v123 = vsel %vm122, %v114, 0.0
    %v124 = vld [vmem:[#allocation2 + $0x8] sm:$0xff]
    %v125 = vld [vmem:[#allocation2 + $0x20] sm:$0xff]
    %v126 = vld [vmem:[#allocation2 + $0x38] sm:$0xff]
    %v127 = vld [vmem:[#allocation2 + $0x50] sm:$0xff]
    %v128 = vld [vmem:[%s3 + $0x1] sm:$0x1]
    %v129 = vlaneseq
    %v130 = vshrl.u32 %v129, 7
    %v131 = vsub.s32 0, %v130
    %v132 = vrot.slane %v128, %v131
    %133 = vmatprep.subr.mxu0 0.0
    %134 = vmatpush1.msra.mxu0 %v124
    %135 = vmatprep.subr.mxu0 0.0
    %136 = vmatpush1.msra.mxu0 %v125
    %137 = vmatprep.subr.mxu0 0.0
    %138 = vmatpush1.msra.mxu0 %v126
    %139 = vmatprep.subr.mxu0 0.0
    %140 = vmatpush1.msra.mxu0 %v127
    %141 = vmatprep.subr.mxu0 0.0
    %142 = vmatpush1.msra.mxu0 0.0
    %143 = vmatprep.subr.mxu0 0.0
    %144 = vmatpush1.msra.mxu0 0.0
    %145 = vmatprep.subr.mxu0 0.0
    %146 = vmatpush1.msra.mxu0 0.0
    %147 = vmatprep.subr.mxu0 0.0
    %148 = vmatpush1.msra.mxu0 0.0
    %149 = vmatprep.subr.mxu0 0.0
    %150 = vmatpush1.msra.mxu0 0.0
    %151 = vmatprep.subr.mxu0 0.0
    %152 = vmatpush1.msra.mxu0 0.0
    %153 = vmatprep.subr.mxu0 0.0
    %154 = vmatpush1.msra.mxu0 0.0
    %155 = vmatprep.subr.mxu0 0.0
    %156 = vmatpush1.msra.mxu0 0.0
    %157 = vmatprep.subr.mxu0 0.0
    %158 = vmatpush1.msra.mxu0 0.0
    %159 = vmatprep.subr.mxu0 0.0
    %160 = vmatpush1.msra.mxu0 0.0
    %161 = vmatprep.subr.mxu0 0.0
    %162 = vmatpush1.msra.mxu0 0.0
    %163 = vmatprep.subr.mxu0 0.0
    %164 = vmatpush1.msra.mxu0 0.0
    %165 = vmatprep.subr.mxu0 0.0
    %166 = vmatpush1.msra.mxu0 0.0
    %167 = vmatprep.subr.mxu0 0.0
    %168 = vmatpush1.msra.mxu0 0.0
    %169 = vmatprep.subr.mxu0 0.0
    %170 = vmatpush1.msra.mxu0 0.0
    %171 = vmatprep.subr.mxu0 0.0
    %172 = vmatpush1.msra.mxu0 0.0
    %173 = vmatprep.subr.mxu0 0.0
    %174 = vmatpush1.msra.mxu0 0.0
    %175 = vmatprep.subr.mxu0 0.0
    %176 = vmatpush1.msra.mxu0 0.0
    %177 = vmatprep.subr.mxu0 0.0
    %178 = vmatpush1.msra.mxu0 0.0
    %179 = vmatprep.subr.mxu0 0.0
    %180 = vmatpush1.msra.mxu0 0.0
    %181 = vmatprep.subr.mxu0 0.0
    %182 = vmatpush1.msra.mxu0 0.0
    %183 = vmatprep.subr.mxu0 0.0
    %184 = vmatpush1.msra.mxu0 0.0
    %185 = vmatprep.subr.mxu0 0.0
    %186 = vmatpush1.msra.mxu0 0.0
    %187 = vmatprep.subr.mxu0 0.0
    %188 = vmatpush1.msra.mxu0 0.0
    %189 = vmatprep.subr.mxu0 0.0
    %190 = vmatpush1.msra.mxu0 0.0
    %191 = vmatprep.subr.mxu0 0.0
    %192 = vmatpush1.msra.mxu0 0.0
    %193 = vmatprep.subr.mxu0 0.0
    %194 = vmatpush1.msra.mxu0 0.0
    %195 = vmatprep.subr.mxu0 0.0
    %196 = vmatpush1.msra.mxu0 0.0
    %197 = vmatprep.mubr.f32.mxu0 0.0
    %198 = vmatmul.mubr.f32.gmra.mrb[0].mxu0 %v45
    %v199 = vpop.f32.mrb[0].mxu0
    %v200 = vadd.f32 %v132, %v199
    %v201 = vpop.f32.mrb[0].mxu0
    %202 = vdwg.mxu0
    %vm203 = vcmp.eq.s32.totalorder %v33, 1
    %v204 = vsel %vm203, 1, 0
    %205 = vset.pattern.permute.xlu0 0
    %206 = vperm.xlu0 %205, %v204
    %v207 = vpop.permute.xlu0 %206
    %vm208 = vcmp.eq.s32.totalorder %v207, 1
    %v209 = vsel %vm208, %v200, %v123
    %v210 = vld [vmem:[#allocation2 + $0x10] sm:$0xff]
    %v211 = vld [vmem:[#allocation2 + $0x28] sm:$0xff]
    %v212 = vld [vmem:[#allocation2 + $0x40] sm:$0xff]
    %v213 = vld [vmem:[#allocation2 + $0x58] sm:$0xff]
    %v214 = vld [vmem:[%s3 + $0x2] sm:$0x1]
    %v215 = vlaneseq
    %v216 = vshrl.u32 %v215, 7
    %v217 = vsub.s32 0, %v216
    %v218 = vrot.slane %v214, %v217
    %219 = vmatprep.subr.mxu0 0.0
    %220 = vmatpush1.msra.mxu0 %v210
    %221 = vmatprep.subr.mxu0 0.0
    %222 = vmatpush1.msra.mxu0 %v211
    %223 = vmatprep.subr.mxu0 0.0
    %224 = vmatpush1.msra.mxu0 %v212
    %225 = vmatprep.subr.mxu0 0.0
    %226 = vmatpush1.msra.mxu0 %v213
    %227 = vmatprep.subr.mxu0 0.0
    %228 = vmatpush1.msra.mxu0 0.0
    %229 = vmatprep.subr.mxu0 0.0
    %230 = vmatpush1.msra.mxu0 0.0
    %231 = vmatprep.subr.mxu0 0.0
    %232 = vmatpush1.msra.mxu0 0.0
    %233 = vmatprep.subr.mxu0 0.0
    %234 = vmatpush1.msra.mxu0 0.0
    %235 = vmatprep.subr.mxu0 0.0
    %236 = vmatpush1.msra.mxu0 0.0
    %237 = vmatprep.subr.mxu0 0.0
    %238 = vmatpush1.msra.mxu0 0.0
    %239 = vmatprep.subr.mxu0 0.0
    %240 = vmatpush1.msra.mxu0 0.0
    %241 = vmatprep.subr.mxu0 0.0
    %242 = vmatpush1.msra.mxu0 0.0
    %243 = vmatprep.subr.mxu0 0.0
    %244 = vmatpush1.msra.mxu0 0.0
    %245 = vmatprep.subr.mxu0 0.0
    %246 = vmatpush1.msra.mxu0 0.0
    %247 = vmatprep.subr.mxu0 0.0
    %248 = vmatpush1.msra.mxu0 0.0
    %249 = vmatprep.subr.mxu0 0.0
    %250 = vmatpush1.msra.mxu0 0.0
    %251 = vmatprep.subr.mxu0 0.0
    %252 = vmatpush1.msra.mxu0 0.0
    %253 = vmatprep.subr.mxu0 0.0
    %254 = vmatpush1.msra.mxu0 0.0
    %255 = vmatprep.subr.mxu0 0.0
    %256 = vmatpush1.msra.mxu0 0.0
    %257 = vmatprep.subr.mxu0 0.0
    %258 = vmatpush1.msra.mxu0 0.0
    %259 = vmatprep.subr.mxu0 0.0
    %260 = vmatpush1.msra.mxu0 0.0
    %261 = vmatprep.subr.mxu0 0.0
    %262 = vmatpush1.msra.mxu0 0.0
    %263 = vmatprep.subr.mxu0 0.0
    %264 = vmatpush1.msra.mxu0 0.0
    %265 = vmatprep.subr.mxu0 0.0
    %266 = vmatpush1.msra.mxu0 0.0
    %267 = vmatprep.subr.mxu0 0.0
    %268 = vmatpush1.msra.mxu0 0.0
    %269 = vmatprep.subr.mxu0 0.0
    %270 = vmatpush1.msra.mxu0 0.0
    %271 = vmatprep.subr.mxu0 0.0
    %272 = vmatpush1.msra.mxu0 0.0
    %273 = vmatprep.subr.mxu0 0.0
    %274 = vmatpush1.msra.mxu0 0.0
    %275 = vmatprep.subr.mxu0 0.0
    %276 = vmatpush1.msra.mxu0 0.0
    %277 = vmatprep.subr.mxu0 0.0
    %278 = vmatpush1.msra.mxu0 0.0
    %279 = vmatprep.subr.mxu0 0.0
    %280 = vmatpush1.msra.mxu0 0.0
    %281 = vmatprep.subr.mxu0 0.0
    %282 = vmatpush1.msra.mxu0 0.0
    %283 = vmatprep.mubr.f32.mxu0 0.0
    %284 = vmatmul.mubr.f32.gmra.mrb[0].mxu0 %v45
    %v285 = vpop.f32.mrb[0].mxu0
    %v286 = vadd.f32 %v218, %v285
    %v287 = vpop.f32.mrb[0].mxu0
    %288 = vdwg.mxu0
    %vm289 = vcmp.eq.s32.totalorder %v33, 2
    %v290 = vsel %vm289, 1, 0
    %291 = vset.pattern.permute.xlu0 0
    %292 = vperm.xlu0 %291, %v290
    %v293 = vpop.permute.xlu0 %292
    %vm294 = vcmp.eq.s32.totalorder %v293, 1
    %v295 = vsel %vm294, %v286, %v209
    %296 = vst [vmem:[#allocation5] sm:$0xff] %v295
    // Predicated region
    $region22: #{tpu_custom_call.1} parent=1 // pred_check
      _
    $region23: #{tpu_custom_call.1} parent=1 // pred_check_branch
      %298 = sbr.rel (0) target = $region25
    $region24: #{tpu_custom_call.1} parent=1 // pred_region
      %s300 = ssub.s32 128, 128
      %301 = vsyncadd [#allocation4], %s300
      %s303 = sshll.u32 [#allocation5], 4
      %s304 = int_to_ptr.vmem [resolvable:$true] %s303
      %306 = dma.vmem_to_hbm [thread:$0]  %s304, 128, %s4, [#allocation4]
    $region25: #{tpu_custom_call.1} parent=1 // pred_fallthru
      _
    // Predicated region
    $region26: #{tpu_custom_call.1} parent=1 // pred_check
      _
    $region27: #{tpu_custom_call.1} parent=1 // pred_check_branch
      %308 = sbr.rel (0) target = $region29
    $region28: #{tpu_custom_call.1} parent=1 // pred_region
      %309 = dma.done [#allocation4], 128
    $region29: #{tpu_custom_call.1} parent=1 // pred_fallthru
      _
    %310 = vsyncpa [#allocation3], 1
    %311 = vsyncpa [#allocation4], 1

</llo_original>
